<compile_context>
chip_gen: v6e
topology: v6e:2x2x1
jax: 0.10.0
libtpu: 0.0.40
codegen_flags: <defaults>
</compile_context>

<pallas_src>
import functools

import jax
import jax.numpy as jnp
from jax.experimental import pallas as pl
from jax.experimental.pallas import tpu as pltpu


def _sigmoid(x):
    """sigmoid via a single EUP tanh: sigmoid(x) = 0.5*tanh(x/2) + 0.5."""
    return 0.5 * jnp.tanh(0.5 * x) + 0.5


def _conv_module_kernel(x_ref, w1_ref, b1_ref, dw_ref, dwb_ref,
                        scale_ref, shift_ref, w2_ref, b2_ref, o_ref,
                        y_scr, *, K, Kh):
    """One batch chunk per grid step; the whole module fused in VMEM."""
    Bb, T, D = x_ref.shape
    Dp = dw_ref.shape[1]
    M = Bb * T

    # pointwise_conv1: fold batch into M, bf16 operands on the MXU, f32 acc.
    x2 = x_ref[...].reshape(M, D).astype(jnp.bfloat16)
    h = jnp.dot(x2, w1_ref[...], preferred_element_type=jnp.float32) + b1_ref[...]

    # GLU over channels: halves sit on separate 128-lane groups -> pure views.
    a = h[:, :Dp]
    g = h[:, Dp:]
    y = a * _sigmoid(g)                                # (M, Dp) f32
    y3 = y.reshape(Bb, T, Dp)

    # Causal depthwise FIR along time.  Stage y with Kh zero halo rows in
    # front of every sequence; each tap is a shifted window load + FMA
    # (vld slot), no per-tap mask/select, no cross-batch leakage.
    dw = dw_ref[...]                                   # (K, Dp), read once
    acc = y3 * dw[K - 1, :]                            # shift-0 tap, no zeros init
    if K > 1:
        y_scr[:, :Kh, :] = jnp.zeros((Bb, Kh, Dp), jnp.float32)
        y_scr[:, Kh:, :] = y3
        for s in range(1, K):                          # K static -> unrolled
            tap = y_scr[:, Kh - s:Kh - s + T, :]       # y[t - s], zeros for t < s
            acc = acc + tap * dw[K - 1 - s, :]
    acc = acc + dwb_ref[...]

    # BatchNorm1d (eval, folded to per-channel scale/shift), then Swish (f32).
    acc = acc * scale_ref[...] + shift_ref[...]
    acc = acc * _sigmoid(acc)

    # pointwise_conv2 on the MXU (bf16 operands, f32 acc).
    out = jnp.dot(acc.reshape(M, Dp).astype(jnp.bfloat16), w2_ref[...],
                  preferred_element_type=jnp.float32) + b2_ref[...]
    o_ref[...] = out.reshape(Bb, T, D).astype(o_ref.dtype)


def _pick_batch_block(B, T, D, Dp, vmem_cap):
    """Largest divisor of B whose folded row count (b_blk*T) fits the per-step
    VMEM budget, capped so the grid has >= 2 steps (feeds both v7x cores)."""
    # Rough f32 bytes per folded row: x/out blocks (2-deep each), h (2*Dp) and
    # ~8 Dp-wide intermediates (y, acc, taps, halo scratch, swish temps).
    per_row = 4 * 4 * D + 2 * 4 * 2 * Dp + 8 * 4 * Dp
    budget = vmem_cap // 3
    rows_cap = max(T, min(4096, budget // max(per_row, 1)))
    cap = max(1, rows_cap // max(T, 1))
    if B >= 2:
        cap = min(cap, max(1, B // 2))                 # >= 2 parallel grid steps
    for bb in range(min(B, cap), 0, -1):
        if B % bb == 0:
            return bb
    return 1  # TODO(synk): masked/clamped last block for prime B instead of 1.


def custom_conv_forward(x, params, kernel_size):
    """x: (B, T, D) float32. params: dict of weights (see __main__)."""
    B, T, D = x.shape
    K = kernel_size
    eps = 1e-5
    f32 = jnp.float32

    # Keep T a multiple of 8 so the (Bb,T,*)<->(M,*) folds are free views.
    t_pad = (-T) % 8
    if t_pad:
        # TODO(synk): extra HBM pass; keep T a multiple of 8 at model level.
        x = jnp.pad(x, ((0, 0), (0, t_pad), (0, 0)))
    Tk = T + t_pad

    Dp = ((D + 127) // 128) * 128                      # lane-group width (intermediates)
    Kh = (((K - 1) + 7) // 8) * 8 if K > 1 else 0      # halo rows, sublane aligned
    Tp = Tk + Kh

    # Fold BN running stats into per-channel scale/shift (eval semantics).
    bn_scale = params["bn_gamma"] / jnp.sqrt(params["bn_var"] + eps)
    bn_shift = params["bn_beta"] - params["bn_mean"] * bn_scale

    # Lane-padded weight layouts.  pointwise_conv1's 'a' and 'gate' output
    # halves are placed on separate Dp-wide groups so the GLU split in the
    # kernel is tile-aligned.  Matmul weights are bf16 (MXU rate).
    w1 = jnp.zeros((D, 2 * Dp), f32)
    w1 = w1.at[:, :D].set(params["pw1_w"][:, :D])
    w1 = w1.at[:, Dp:Dp + D].set(params["pw1_w"][:, D:])
    w1 = w1.astype(jnp.bfloat16)
    b1 = jnp.zeros((1, 2 * Dp), f32)
    b1 = b1.at[0, :D].set(params["pw1_b"][:D])
    b1 = b1.at[0, Dp:Dp + D].set(params["pw1_b"][D:])

    dw = jnp.zeros((K, Dp), f32).at[:, :D].set(params["dw_w"])
    dwb = jnp.zeros((1, Dp), f32).at[0, :D].set(params["dw_b"])
    scale = jnp.zeros((1, Dp), f32).at[0, :D].set(bn_scale)
    shift = jnp.zeros((1, Dp), f32).at[0, :D].set(bn_shift)

    w2 = jnp.zeros((Dp, D), f32).at[:D, :].set(params["pw2_w"]).astype(jnp.bfloat16)
    b2 = params["pw2_b"].reshape(1, D).astype(f32)

    # Generation-aware VMEM capacity (64 MiB on v7x vs 128 MiB on v5e/v6e).
    try:
        vmem_cap = int(pltpu.get_tpu_info().vmem_capacity_bytes)
    except Exception:
        vmem_cap = 64 * 2 ** 20

    b_blk = _pick_batch_block(B, Tk, D, Dp, vmem_cap)
    grid = (B // b_blk,)
    m_rows = b_blk * Tk

    # Explicit VMEM budget: double-buffered x/out blocks + weights + halo
    # scratch + f32 intermediates, with 2x headroom, capped at 3/4 of the
    # chip's physical VMEM (leaves room for Mosaic internal scratch).
    est = (4 * m_rows * D * 4                                     # x + out, 2-deep each
           + 2 * (D * 2 * Dp * 2 + Dp * D * 2 + (K + 8) * Dp * 4)  # weights/vectors
           + b_blk * Tp * Dp * 4                                  # halo scratch
           + m_rows * 2 * Dp * 4                                  # h (M, 2Dp)
           + 8 * m_rows * Dp * 4)                                 # y/acc/taps/temps
    vmem_limit = int(min(vmem_cap * 3 // 4, max(2 * est, 8 * 2 ** 20)))

    kernel = functools.partial(_conv_module_kernel, K=K, Kh=Kh)
    out = pl.pallas_call(
        kernel,
        out_shape=jax.ShapeDtypeStruct((B, Tk, D), x.dtype),
        grid_spec=pltpu.PrefetchScalarGridSpec(
            num_scalar_prefetch=0,
            grid=grid,
            in_specs=[
                pl.BlockSpec((b_blk, Tk, D), lambda b: (b, 0, 0)),   # x
                pl.BlockSpec((D, 2 * Dp), lambda b: (0, 0)),         # w1 (bf16)
                pl.BlockSpec((1, 2 * Dp), lambda b: (0, 0)),         # b1
                pl.BlockSpec((K, Dp), lambda b: (0, 0)),             # depthwise w
                pl.BlockSpec((1, Dp), lambda b: (0, 0)),             # depthwise b
                pl.BlockSpec((1, Dp), lambda b: (0, 0)),             # bn scale
                pl.BlockSpec((1, Dp), lambda b: (0, 0)),             # bn shift
                pl.BlockSpec((Dp, D), lambda b: (0, 0)),             # w2 (bf16)
                pl.BlockSpec((1, D), lambda b: (0, 0)),              # b2
            ],
            out_specs=pl.BlockSpec((b_blk, Tk, D), lambda b: (b, 0, 0)),
            scratch_shapes=[pltpu.VMEM((b_blk, Tp, Dp), f32)],       # halo-staged y
        ),
        compiler_params=pltpu.CompilerParams(
            dimension_semantics=("parallel",),
            vmem_limit_bytes=vmem_limit),
    )(x, w1, b1, dw, dwb, scale, shift, w2, b2)

    return out if t_pad == 0 else out[:, :T, :]


if __name__ == "__main__":
    # Small shapes implied by the conformer conv module.
    B, T, D = 2, 16, 32
    K = 5  # depthwise kernel size; causal left padding = K - 1

    key = jax.random.PRNGKey(0)
    ks = jax.random.split(key, 10)

    # Deterministic synthetic parameters (PyTorch Conv1d weights would be
    # (out, in, k); stored pre-transposed for the kernel layout).
    params = {
        "pw1_w": jax.random.normal(ks[0], (D, 2 * D), jnp.float32) * 0.1,   # conv1 (2D,D,1) -> (D,2D)
        "pw1_b": jax.random.normal(ks[1], (2 * D,), jnp.float32) * 0.1,
        "dw_w": jax.random.normal(ks[2], (K, D), jnp.float32) * 0.1,        # depthwise (D,1,K) -> (K,D)
        "dw_b": jax.random.normal(ks[3], (D,), jnp.float32) * 0.1,
        "bn_gamma": 1.0 + 0.1 * jax.random.normal(ks[4], (D,), jnp.float32),
        "bn_beta": 0.1 * jax.random.normal(ks[5], (D,), jnp.float32),
        "bn_mean": 0.1 * jax.random.normal(ks[6], (D,), jnp.float32),
        "bn_var": 1.0 + 0.1 * jax.nn.softplus(jax.random.normal(ks[7], (D,), jnp.float32)),
        "pw2_w": jax.random.normal(ks[8], (D, D), jnp.float32) * 0.1,       # conv2 (D,D,1) -> (D,D)
        "pw2_b": jax.random.normal(ks[9], (D,), jnp.float32) * 0.1,
    }

    x = jax.random.normal(jax.random.PRNGKey(1), (B, T, D), jnp.float32)

    out = custom_conv_forward(x, params, kernel_size=K)
    out = jax.block_until_ready(out)

    # Pure-JAX f32 reference for sanity.
    def ref(x):
        h = x @ params["pw1_w"] + params["pw1_b"]            # (B,T,2D)
        a, g = h[..., :D], h[..., D:]
        y = a * jax.nn.sigmoid(g)
        yp = jnp.pad(y, ((0, 0), (K - 1, 0), (0, 0)))
        acc = sum(yp[:, k:k + T, :] * params["dw_w"][k] for k in range(K))
        acc = acc + params["dw_b"]
        scale = params["bn_gamma"] / jnp.sqrt(params["bn_var"] + 1e-5)
        shift = params["bn_beta"] - params["bn_mean"] * scale
        acc = acc * scale + shift
        acc = acc * jax.nn.sigmoid(acc)
        return acc @ params["pw2_w"] + params["pw2_b"]

    # Tolerance loosened vs f32 because the kernel feeds bf16 operands to the
    # MXU (accumulation stays f32).
    assert jnp.allclose(out, ref(x), atol=3e-2, rtol=3e-2)

    # TODO(synk): QuantStub/DeQuantStub are identity in the float (un-converted)
    # module; fake/int8 quantization (fp8 on v7x) and training-mode BatchNorm
    # (batch statistics) are not modeled.
    print("KERNEL_OK")
</pallas_src>

<mosaic_0001>
module attributes {stable_mosaic.version = 11 : i64} {
  func.func @_conv_module_kernel(%arg0: i32, %arg1: memref<1x16x32xf32, #tpu.memory_space<vmem>>, %arg2: memref<32x256xbf16, #tpu.memory_space<vmem>>, %arg3: memref<1x256xf32, #tpu.memory_space<vmem>>, %arg4: memref<5x128xf32, #tpu.memory_space<vmem>>, %arg5: memref<1x128xf32, #tpu.memory_space<vmem>>, %arg6: memref<1x128xf32, #tpu.memory_space<vmem>>, %arg7: memref<1x128xf32, #tpu.memory_space<vmem>>, %arg8: memref<128x32xbf16, #tpu.memory_space<vmem>>, %arg9: memref<1x32xf32, #tpu.memory_space<vmem>>, %arg10: memref<1x16x32xf32, #tpu.memory_space<vmem>>, %arg11: memref<1x24x128xf32, #tpu.memory_space<vmem>>) attributes {dimension_semantics = [#tpu.dimension_semantics<parallel>], iteration_bounds = array<i64: 2>, scalar_prefetch = 0 : i64, scratch_operands = 1 : i64, tpu.core_type = #tpu.core_type<tc>, window_params = [{transform_indices = @transform_0, window_bounds = array<i64: 1, 16, 32>}, {pipeline_mode = #tpu.pipeline_mode<synchronous>, transform_indices = @transform_1, window_bounds = array<i64: 32, 256>}, {pipeline_mode = #tpu.pipeline_mode<synchronous>, transform_indices = @transform_2, window_bounds = array<i64: 1, 256>}, {pipeline_mode = #tpu.pipeline_mode<synchronous>, transform_indices = @transform_3, window_bounds = array<i64: 5, 128>}, {pipeline_mode = #tpu.pipeline_mode<synchronous>, transform_indices = @transform_4, window_bounds = array<i64: 1, 128>}, {pipeline_mode = #tpu.pipeline_mode<synchronous>, transform_indices = @transform_5, window_bounds = array<i64: 1, 128>}, {pipeline_mode = #tpu.pipeline_mode<synchronous>, transform_indices = @transform_6, window_bounds = array<i64: 1, 128>}, {pipeline_mode = #tpu.pipeline_mode<synchronous>, transform_indices = @transform_7, window_bounds = array<i64: 128, 32>}, {pipeline_mode = #tpu.pipeline_mode<synchronous>, transform_indices = @transform_8, window_bounds = array<i64: 1, 32>}, {transform_indices = @transform_9, window_bounds = array<i64: 1, 16, 32>}]} {
    %c0 = arith.constant 0 : index
    %c0_0 = arith.constant 0 : index
    %c0_1 = arith.constant 0 : index
    %0 = vector.load %arg1[%c0, %c0_0, %c0_1] : memref<1x16x32xf32, #tpu.memory_space<vmem>>, vector<1x16x32xf32>
    %1 = vector.shape_cast %0 : vector<1x16x32xf32> to vector<16x32xf32>
    %2 = arith.truncf %1 : vector<16x32xf32> to vector<16x32xbf16>
    %c0_2 = arith.constant 0 : index
    %c0_3 = arith.constant 0 : index
    %3 = vector.load %arg2[%c0_2, %c0_3] : memref<32x256xbf16, #tpu.memory_space<vmem>>, vector<32x256xbf16>
    %cst = arith.constant dense<0.000000e+00> : vector<16x256xf32>
    %4 = tpu.matmul %2, %3, %cst {dimension_numbers = #tpu.dot_dimension_numbers<[1], [0], [0], [1], [0, 0, 1, 1], [], []>} : vector<16x32xbf16>, vector<32x256xbf16>, vector<16x256xf32> -> vector<16x256xf32>
    %c0_4 = arith.constant 0 : index
    %c0_5 = arith.constant 0 : index
    %5 = vector.load %arg3[%c0_4, %c0_5] : memref<1x256xf32, #tpu.memory_space<vmem>>, vector<1x256xf32>
    %6 = vector.broadcast %5 : vector<1x256xf32> to vector<16x256xf32>
    %7 = arith.addf %4, %6 : vector<16x256xf32>
    %8 = vector.extract_strided_slice %7 {offsets = [0, 0], sizes = [16, 128], strides = [1, 1]} : vector<16x256xf32> to vector<16x128xf32>
    %9 = vector.extract_strided_slice %7 {offsets = [0, 128], sizes = [16, 128], strides = [1, 1]} : vector<16x256xf32> to vector<16x128xf32>
    %cst_6 = arith.constant 5.000000e-01 : f32
    %10 = vector.broadcast %cst_6 : f32 to vector<16x128xf32>
    %11 = arith.mulf %10, %9 : vector<16x128xf32>
    %12 = math.tanh %11 : vector<16x128xf32>
    %cst_7 = arith.constant 5.000000e-01 : f32
    %13 = vector.broadcast %cst_7 : f32 to vector<16x128xf32>
    %14 = arith.mulf %13, %12 : vector<16x128xf32>
    %cst_8 = arith.constant 5.000000e-01 : f32
    %15 = vector.broadcast %cst_8 : f32 to vector<16x128xf32>
    %16 = arith.addf %14, %15 : vector<16x128xf32>
    %17 = arith.mulf %8, %16 : vector<16x128xf32>
    %18 = vector.shape_cast %17 : vector<16x128xf32> to vector<1x16x128xf32>
    %c0_9 = arith.constant 0 : index
    %c0_10 = arith.constant 0 : index
    %19 = vector.load %arg4[%c0_9, %c0_10] : memref<5x128xf32, #tpu.memory_space<vmem>>, vector<5x128xf32>
    %20 = vector.extract_strided_slice %19 {offsets = [4, 0], sizes = [1, 128], strides = [1, 1]} : vector<5x128xf32> to vector<1x128xf32>
    %21 = vector.shape_cast %20 : vector<1x128xf32> to vector<128xf32>
    %22 = vector.shape_cast %21 : vector<128xf32> to vector<1x1x128xf32>
    %23 = vector.broadcast %22 : vector<1x1x128xf32> to vector<1x16x128xf32>
    %24 = arith.mulf %18, %23 : vector<1x16x128xf32>
    %cst_11 = arith.constant 0.000000e+00 : f32
    %25 = vector.broadcast %cst_11 : f32 to vector<1x8x128xf32>
    %c0_12 = arith.constant 0 : index
    %c0_13 = arith.constant 0 : index
    %c0_14 = arith.constant 0 : index
    %26 = vector.load %arg11[%c0_12, %c0_13, %c0_14] : memref<1x24x128xf32, #tpu.memory_space<vmem>>, vector<1x8x128xf32>
    tpu.vector_store %arg11[%c0_12, %c0_13, %c0_14], %25 {strides = array<i32>} : memref<1x24x128xf32, #tpu.memory_space<vmem>>, vector<1x8x128xf32>,
    %c0_15 = arith.constant 0 : index
    %c8 = arith.constant 8 : index
    %c0_16 = arith.constant 0 : index
    %27 = vector.load %arg11[%c0_15, %c8, %c0_16] : memref<1x24x128xf32, #tpu.memory_space<vmem>>, vector<1x16x128xf32>
    tpu.vector_store %arg11[%c0_15, %c8, %c0_16], %18 {strides = array<i32>} : memref<1x24x128xf32, #tpu.memory_space<vmem>>, vector<1x16x128xf32>,
    %c0_17 = arith.constant 0 : index
    %c7 = arith.constant 7 : index
    %c0_18 = arith.constant 0 : index
    %28 = vector.load %arg11[%c0_17, %c7, %c0_18] : memref<1x24x128xf32, #tpu.memory_space<vmem>>, vector<1x16x128xf32>
    %29 = vector.extract_strided_slice %19 {offsets = [3, 0], sizes = [1, 128], strides = [1, 1]} : vector<5x128xf32> to vector<1x128xf32>
    %30 = vector.shape_cast %29 : vector<1x128xf32> to vector<128xf32>
    %31 = vector.shape_cast %30 : vector<128xf32> to vector<1x1x128xf32>
    %32 = vector.broadcast %31 : vector<1x1x128xf32> to vector<1x16x128xf32>
    %33 = arith.mulf %28, %32 : vector<1x16x128xf32>
    %34 = arith.addf %24, %33 : vector<1x16x128xf32>
    %c0_19 = arith.constant 0 : index
    %c6 = arith.constant 6 : index
    %c0_20 = arith.constant 0 : index
    %35 = vector.load %arg11[%c0_19, %c6, %c0_20] : memref<1x24x128xf32, #tpu.memory_space<vmem>>, vector<1x16x128xf32>
    %36 = vector.extract_strided_slice %19 {offsets = [2, 0], sizes = [1, 128], strides = [1, 1]} : vector<5x128xf32> to vector<1x128xf32>
    %37 = vector.shape_cast %36 : vector<1x128xf32> to vector<128xf32>
    %38 = vector.shape_cast %37 : vector<128xf32> to vector<1x1x128xf32>
    %39 = vector.broadcast %38 : vector<1x1x128xf32> to vector<1x16x128xf32>
    %40 = arith.mulf %35, %39 : vector<1x16x128xf32>
    %41 = arith.addf %34, %40 : vector<1x16x128xf32>
    %c0_21 = arith.constant 0 : index
    %c5 = arith.constant 5 : index
    %c0_22 = arith.constant 0 : index
    %42 = vector.load %arg11[%c0_21, %c5, %c0_22] : memref<1x24x128xf32, #tpu.memory_space<vmem>>, vector<1x16x128xf32>
    %43 = vector.extract_strided_slice %19 {offsets = [1, 0], sizes = [1, 128], strides = [1, 1]} : vector<5x128xf32> to vector<1x128xf32>
    %44 = vector.shape_cast %43 : vector<1x128xf32> to vector<128xf32>
    %45 = vector.shape_cast %44 : vector<128xf32> to vector<1x1x128xf32>
    %46 = vector.broadcast %45 : vector<1x1x128xf32> to vector<1x16x128xf32>
    %47 = arith.mulf %42, %46 : vector<1x16x128xf32>
    %48 = arith.addf %41, %47 : vector<1x16x128xf32>
    %c0_23 = arith.constant 0 : index
    %c4 = arith.constant 4 : index
    %c0_24 = arith.constant 0 : index
    %49 = vector.load %arg11[%c0_23, %c4, %c0_24] : memref<1x24x128xf32, #tpu.memory_space<vmem>>, vector<1x16x128xf32>
    %50 = vector.extract_strided_slice %19 {offsets = [0, 0], sizes = [1, 128], strides = [1, 1]} : vector<5x128xf32> to vector<1x128xf32>
    %51 = vector.shape_cast %50 : vector<1x128xf32> to vector<128xf32>
    %52 = vector.shape_cast %51 : vector<128xf32> to vector<1x1x128xf32>
    %53 = vector.broadcast %52 : vector<1x1x128xf32> to vector<1x16x128xf32>
    %54 = arith.mulf %49, %53 : vector<1x16x128xf32>
    %55 = arith.addf %48, %54 : vector<1x16x128xf32>
    %c0_25 = arith.constant 0 : index
    %c0_26 = arith.constant 0 : index
    %56 = vector.load %arg5[%c0_25, %c0_26] : memref<1x128xf32, #tpu.memory_space<vmem>>, vector<1x128xf32>
    %57 = vector.shape_cast %56 : vector<1x128xf32> to vector<1x1x128xf32>
    %58 = vector.broadcast %57 : vector<1x1x128xf32> to vector<1x16x128xf32>
    %59 = arith.addf %55, %58 : vector<1x16x128xf32>
    %c0_27 = arith.constant 0 : index
    %c0_28 = arith.constant 0 : index
    %60 = vector.load %arg6[%c0_27, %c0_28] : memref<1x128xf32, #tpu.memory_space<vmem>>, vector<1x128xf32>
    %61 = vector.shape_cast %60 : vector<1x128xf32> to vector<1x1x128xf32>
    %62 = vector.broadcast %61 : vector<1x1x128xf32> to vector<1x16x128xf32>
    %63 = arith.mulf %59, %62 : vector<1x16x128xf32>
    %c0_29 = arith.constant 0 : index
    %c0_30 = arith.constant 0 : index
    %64 = vector.load %arg7[%c0_29, %c0_30] : memref<1x128xf32, #tpu.memory_space<vmem>>, vector<1x128xf32>
    %65 = vector.shape_cast %64 : vector<1x128xf32> to vector<1x1x128xf32>
    %66 = vector.broadcast %65 : vector<1x1x128xf32> to vector<1x16x128xf32>
    %67 = arith.addf %63, %66 : vector<1x16x128xf32>
    %cst_31 = arith.constant 5.000000e-01 : f32
    %68 = vector.broadcast %cst_31 : f32 to vector<1x16x128xf32>
    %69 = arith.mulf %68, %67 : vector<1x16x128xf32>
    %70 = math.tanh %69 : vector<1x16x128xf32>
    %cst_32 = arith.constant 5.000000e-01 : f32
    %71 = vector.broadcast %cst_32 : f32 to vector<1x16x128xf32>
    %72 = arith.mulf %71, %70 : vector<1x16x128xf32>
    %cst_33 = arith.constant 5.000000e-01 : f32
    %73 = vector.broadcast %cst_33 : f32 to vector<1x16x128xf32>
    %74 = arith.addf %72, %73 : vector<1x16x128xf32>
    %75 = arith.mulf %67, %74 : vector<1x16x128xf32>
    %76 = vector.shape_cast %75 : vector<1x16x128xf32> to vector<16x128xf32>
    %77 = arith.truncf %76 : vector<16x128xf32> to vector<16x128xbf16>
    %c0_34 = arith.constant 0 : index
    %c0_35 = arith.constant 0 : index
    %78 = vector.load %arg8[%c0_34, %c0_35] : memref<128x32xbf16, #tpu.memory_space<vmem>>, vector<128x32xbf16>
    %cst_36 = arith.constant dense<0.000000e+00> : vector<16x32xf32>
    %79 = tpu.matmul %77, %78, %cst_36 {dimension_numbers = #tpu.dot_dimension_numbers<[1], [0], [0], [1], [0, 0, 1, 1], [], []>} : vector<16x128xbf16>, vector<128x32xbf16>, vector<16x32xf32> -> vector<16x32xf32>
    %c0_37 = arith.constant 0 : index
    %c0_38 = arith.constant 0 : index
    %80 = vector.load %arg9[%c0_37, %c0_38] : memref<1x32xf32, #tpu.memory_space<vmem>>, vector<1x32xf32>
    %81 = vector.broadcast %80 : vector<1x32xf32> to vector<16x32xf32>
    %82 = arith.addf %79, %81 : vector<16x32xf32>
    %83 = vector.shape_cast %82 : vector<16x32xf32> to vector<1x16x32xf32>
    %c0_39 = arith.constant 0 : index
    %c0_40 = arith.constant 0 : index
    %c0_41 = arith.constant 0 : index
    %84 = vector.load %arg10[%c0_39, %c0_40, %c0_41] : memref<1x16x32xf32, #tpu.memory_space<vmem>>, vector<1x16x32xf32>
    tpu.vector_store %arg10[%c0_39, %c0_40, %c0_41], %83 {strides = array<i32>} : memref<1x16x32xf32, #tpu.memory_space<vmem>>, vector<1x16x32xf32>,
    return
  }
  func.func @transform_0(%arg0: i32) -> (i32, i32, i32) {
    %c0_i32 = arith.constant 0 : i32
    %c0_i32_0 = arith.constant 0 : i32
    %c0_i32_1 = arith.constant 0 : i32
    return %arg0, %c0_i32, %c0_i32_0 : i32, i32, i32
  }
  func.func @transform_1(%arg0: i32) -> (i32, i32) {
    %c0_i32 = arith.constant 0 : i32
    %c0_i32_0 = arith.constant 0 : i32
    %c0_i32_1 = arith.constant 0 : i32
    return %c0_i32, %c0_i32_0 : i32, i32
  }
  func.func @transform_2(%arg0: i32) -> (i32, i32) {
    %c0_i32 = arith.constant 0 : i32
    %c0_i32_0 = arith.constant 0 : i32
    %c0_i32_1 = arith.constant 0 : i32
    return %c0_i32, %c0_i32_0 : i32, i32
  }
  func.func @transform_3(%arg0: i32) -> (i32, i32) {
    %c0_i32 = arith.constant 0 : i32
    %c0_i32_0 = arith.constant 0 : i32
    %c0_i32_1 = arith.constant 0 : i32
    return %c0_i32, %c0_i32_0 : i32, i32
  }
  func.func @transform_4(%arg0: i32) -> (i32, i32) {
    %c0_i32 = arith.constant 0 : i32
    %c0_i32_0 = arith.constant 0 : i32
    %c0_i32_1 = arith.constant 0 : i32
    return %c0_i32, %c0_i32_0 : i32, i32
  }
  func.func @transform_5(%arg0: i32) -> (i32, i32) {
    %c0_i32 = arith.constant 0 : i32
    %c0_i32_0 = arith.constant 0 : i32
    %c0_i32_1 = arith.constant 0 : i32
    return %c0_i32, %c0_i32_0 : i32, i32
  }
  func.func @transform_6(%arg0: i32) -> (i32, i32) {
    %c0_i32 = arith.constant 0 : i32
    %c0_i32_0 = arith.constant 0 : i32
    %c0_i32_1 = arith.constant 0 : i32
    return %c0_i32, %c0_i32_0 : i32, i32
  }
  func.func @transform_7(%arg0: i32) -> (i32, i32) {
    %c0_i32 = arith.constant 0 : i32
    %c0_i32_0 = arith.constant 0 : i32
    %c0_i32_1 = arith.constant 0 : i32
    return %c0_i32, %c0_i32_0 : i32, i32
  }
  func.func @transform_8(%arg0: i32) -> (i32, i32) {
    %c0_i32 = arith.constant 0 : i32
    %c0_i32_0 = arith.constant 0 : i32
    %c0_i32_1 = arith.constant 0 : i32
    return %c0_i32, %c0_i32_0 : i32, i32
  }
  func.func @transform_9(%arg0: i32) -> (i32, i32, i32) {
    %c0_i32 = arith.constant 0 : i32
    %c0_i32_0 = arith.constant 0 : i32
    %c0_i32_1 = arith.constant 0 : i32
    return %arg0, %c0_i32, %c0_i32_0 : i32, i32, i32
  }
}

</mosaic_0001>

<llo_original>
// kernel: tpu_custom_call.1
$region0: #{tpu_custom_call.1}
  #allocation0 [shape = 'u32[]', space=smem, size = 0x4, offset = 0x4, fixed_abs, tag = 'smem constant byte address 0x4 - core index']
  #allocation1 [shape = 'u32[144,128]{1,0:T(1,128)}', space=vmem, size = 0x12000, scoped, tag = 'internal scratch']
  #allocation2 [shape = 'f32[1,24,128]{2,1,0:T(8,128)}', space=vmem, size = 0x3000, scoped, tag = 'scratch operand']
  %s0 = inlined_call_operand.vmem [shape: f32[2,16,32], index: 0, kind: input, shape index: {}]
  %s1 = inlined_call_operand.vmem [shape: bf16[32,256], index: 1, kind: input, shape index: {}]
  %s2 = inlined_call_operand.vmem [shape: f32[1,256], index: 2, kind: input, shape index: {}]
  %s3 = inlined_call_operand.vmem [shape: f32[5,128], index: 3, kind: input, shape index: {}]
  %s4 = inlined_call_operand.vmem [shape: f32[1,128], index: 4, kind: input, shape index: {}]
  %s5 = inlined_call_operand.vmem [shape: f32[1,128], index: 5, kind: input, shape index: {}]
  %s6 = inlined_call_operand.vmem [shape: f32[1,128], index: 6, kind: input, shape index: {}]
  %s7 = inlined_call_operand.vmem [shape: bf16[128,32], index: 7, kind: input, shape index: {}]
  %s8 = inlined_call_operand.vmem [shape: f32[1,32], index: 8, kind: input, shape index: {}]
  %s9 = inlined_call_operand.hbm [shape: f32[2,16,32], index: 9, kind: output, shape index: {}]
  %s10 = sld [smem:[#allocation0]]
  $region69: #{tpu_custom_call.1} parent=0
    _
  %s12 = ssub.s32 1, %s10
  %s13 = scalar_select 0, %s12, %s10
  $region1: #{tpu_custom_call.1} parent=0
    #allocation3 [shape = 'u8[16384]{0}', space=vmem, size = 0x4000, scoped, tag = 'output window, operand 0']
    #allocation4 [shape = 's32[2]{0}', space=sflag, size = 0x8, scoped, tag = 'scoped memory for tpu_custom_call.1']
    %14 = vsyncpa [#allocation4], 0
    %s15 = scalar_lea.sflag [#allocation4], 1
    %16 = vsyncpa %s15, 0
    loop: start=0, step=1, limit=4
    $region2: #{tpu_custom_call.1} parent=1 // loop_pre_header
      _
    $region3: #{tpu_custom_call.1} parent=1 // loop_header
      %s18 = sphi 0, %s22
      %p19 = scmp.ge.s32.totalorder %s18, 4
      %s28 = sphi 0, %s30
      %s31 = sphi 0, %s28
      %s32 = sphi 0, %s31
      %s48 = sphi 0, %s32
      %s52 = sphi 0, %s52
      %s54 = sphi 0, %s52
      %s55 = sphi 0, %s54
      %s69 = sphi 0, %s55
      %s73 = sphi 0, %s73
      %s75 = sphi 0, %s73
      %s76 = sphi 0, %s75
      %s90 = sphi 0, %s76
      %s94 = sphi 0, %s94
      %s96 = sphi 0, %s94
      %s97 = sphi 0, %s96
      %s111 = sphi 0, %s97
      %s115 = sphi 0, %s115
      %s117 = sphi 0, %s115
      %s118 = sphi 0, %s117
      %s132 = sphi 0, %s118
      %s136 = sphi 0, %s136
      %s138 = sphi 0, %s136
      %s139 = sphi 0, %s138
      %s153 = sphi 0, %s139
      %s157 = sphi 0, %s157
      %s159 = sphi 0, %s157
      %s160 = sphi 0, %s159
      %s174 = sphi 0, %s160
      %s178 = sphi 0, %s178
      %s180 = sphi 0, %s178
      %s181 = sphi 0, %s180
      %s195 = sphi 0, %s181
      %s199 = sphi 0, %s199
      %s201 = sphi 0, %s199
      %s202 = sphi 0, %s201
      %s216 = sphi 0, %s202
      %s222 = sphi 0, %s224
      %s225 = sphi 0, %s222
      %s226 = sphi 0, %s225
      %s242 = sphi 0, %s226
    $region4: #{tpu_custom_call.1} parent=1 // loop_header_branch
      %21 = sbr.rel (%p19) target = $region8
    $region5: #{tpu_custom_call.1} parent=1 // loop_body
      %s23 = ssub.s32 %s18, 1
      %s24 = ssub.s32 %s18, 2
      %s25 = sadd.s32 %s18, 1
      %s26 = ssub.s32 %s18, %s25
      %p27 = scmp.eq.s32.totalorder %s26, 0
      %s29 = sadd.s32 %s28, 1
      %s30 = scalar_select %p27, %s28, %s29
      %p33 = pneg %p27
      %p34 = scmp.eq.s32.totalorder %s18, 1
      %p35 = por %p33, %p34
      %p36 = scmp.ne.s32.totalorder %s28, %s31
      %p37 = scmp.eq.s32.totalorder %s18, 0
      %p38 = por %p36, %p37
      %p39 = scmp.ne.s32.totalorder %s28, %s31
      %p40 = scmp.eq.s32.totalorder %s23, 1
      %p41 = por %p39, %p40
      %p42 = scmp.ne.s32.totalorder %s31, %s32
      %p43 = scmp.eq.s32.totalorder %s23, 0
      %p44 = por %p42, %p43
      %p45 = scmp.ne.s32.totalorder %s31, %s32
      %p46 = scmp.eq.s32.totalorder %s24, 1
      %p47 = por %p45, %p46
      %p49 = scmp.ne.s32.totalorder %s32, %s48
      %p50 = scmp.eq.s32.totalorder %s24, 0
      %p51 = por %p49, %p50
      %s53 = sadd.s32 %s52, 1
      %p56 = scmp.eq.s32.totalorder %s18, 1
      %p57 = scmp.ne.s32.totalorder %s52, %s54
      %p58 = scmp.eq.s32.totalorder %s18, 0
      %p59 = por %p57, %p58
      %p60 = scmp.ne.s32.totalorder %s52, %s54
      %p61 = scmp.eq.s32.totalorder %s23, 1
      %p62 = por %p60, %p61
      %p63 = scmp.ne.s32.totalorder %s54, %s55
      %p64 = scmp.eq.s32.totalorder %s23, 0
      %p65 = por %p63, %p64
      %p66 = scmp.ne.s32.totalorder %s54, %s55
      %p67 = scmp.eq.s32.totalorder %s24, 1
      %p68 = por %p66, %p67
      %p70 = scmp.ne.s32.totalorder %s55, %s69
      %p71 = scmp.eq.s32.totalorder %s24, 0
      %p72 = por %p70, %p71
      %s74 = sadd.s32 %s73, 1
      %p77 = scmp.eq.s32.totalorder %s18, 1
      %p78 = scmp.ne.s32.totalorder %s73, %s75
      %p79 = scmp.eq.s32.totalorder %s18, 0
      %p80 = por %p78, %p79
      %p81 = scmp.ne.s32.totalorder %s73, %s75
      %p82 = scmp.eq.s32.totalorder %s23, 1
      %p83 = por %p81, %p82
      %p84 = scmp.ne.s32.totalorder %s75, %s76
      %p85 = scmp.eq.s32.totalorder %s23, 0
      %p86 = por %p84, %p85
      %p87 = scmp.ne.s32.totalorder %s75, %s76
      %p88 = scmp.eq.s32.totalorder %s24, 1
      %p89 = por %p87, %p88
      %p91 = scmp.ne.s32.totalorder %s76, %s90
      %p92 = scmp.eq.s32.totalorder %s24, 0
      %p93 = por %p91, %p92
      %s95 = sadd.s32 %s94, 1
      %p98 = scmp.eq.s32.totalorder %s18, 1
      %p99 = scmp.ne.s32.totalorder %s94, %s96
      %p100 = scmp.eq.s32.totalorder %s18, 0
      %p101 = por %p99, %p100
      %p102 = scmp.ne.s32.totalorder %s94, %s96
      %p103 = scmp.eq.s32.totalorder %s23, 1
      %p104 = por %p102, %p103
      %p105 = scmp.ne.s32.totalorder %s96, %s97
      %p106 = scmp.eq.s32.totalorder %s23, 0
      %p107 = por %p105, %p106
      %p108 = scmp.ne.s32.totalorder %s96, %s97
      %p109 = scmp.eq.s32.totalorder %s24, 1
      %p110 = por %p108, %p109
      %p112 = scmp.ne.s32.totalorder %s97, %s111
      %p113 = scmp.eq.s32.totalorder %s24, 0
      %p114 = por %p112, %p113
      %s116 = sadd.s32 %s115, 1
      %p119 = scmp.eq.s32.totalorder %s18, 1
      %p120 = scmp.ne.s32.totalorder %s115, %s117
      %p121 = scmp.eq.s32.totalorder %s18, 0
      %p122 = por %p120, %p121
      %p123 = scmp.ne.s32.totalorder %s115, %s117
      %p124 = scmp.eq.s32.totalorder %s23, 1
      %p125 = por %p123, %p124
      %p126 = scmp.ne.s32.totalorder %s117, %s118
      %p127 = scmp.eq.s32.totalorder %s23, 0
      %p128 = por %p126, %p127
      %p129 = scmp.ne.s32.totalorder %s117, %s118
      %p130 = scmp.eq.s32.totalorder %s24, 1
      %p131 = por %p129, %p130
      %p133 = scmp.ne.s32.totalorder %s118, %s132
      %p134 = scmp.eq.s32.totalorder %s24, 0
      %p135 = por %p133, %p134
      %s137 = sadd.s32 %s136, 1
      %p140 = scmp.eq.s32.totalorder %s18, 1
      %p141 = scmp.ne.s32.totalorder %s136, %s138
      %p142 = scmp.eq.s32.totalorder %s18, 0
      %p143 = por %p141, %p142
      %p144 = scmp.ne.s32.totalorder %s136, %s138
      %p145 = scmp.eq.s32.totalorder %s23, 1
      %p146 = por %p144, %p145
      %p147 = scmp.ne.s32.totalorder %s138, %s139
      %p148 = scmp.eq.s32.totalorder %s23, 0
      %p149 = por %p147, %p148
      %p150 = scmp.ne.s32.totalorder %s138, %s139
      %p151 = scmp.eq.s32.totalorder %s24, 1
      %p152 = por %p150, %p151
      %p154 = scmp.ne.s32.totalorder %s139, %s153
      %p155 = scmp.eq.s32.totalorder %s24, 0
      %p156 = por %p154, %p155
      %s158 = sadd.s32 %s157, 1
      %p161 = scmp.eq.s32.totalorder %s18, 1
      %p162 = scmp.ne.s32.totalorder %s157, %s159
      %p163 = scmp.eq.s32.totalorder %s18, 0
      %p164 = por %p162, %p163
      %p165 = scmp.ne.s32.totalorder %s157, %s159
      %p166 = scmp.eq.s32.totalorder %s23, 1
      %p167 = por %p165, %p166
      %p168 = scmp.ne.s32.totalorder %s159, %s160
      %p169 = scmp.eq.s32.totalorder %s23, 0
      %p170 = por %p168, %p169
      %p171 = scmp.ne.s32.totalorder %s159, %s160
      %p172 = scmp.eq.s32.totalorder %s24, 1
      %p173 = por %p171, %p172
      %p175 = scmp.ne.s32.totalorder %s160, %s174
      %p176 = scmp.eq.s32.totalorder %s24, 0
      %p177 = por %p175, %p176
      %s179 = sadd.s32 %s178, 1
      %p182 = scmp.eq.s32.totalorder %s18, 1
      %p183 = scmp.ne.s32.totalorder %s178, %s180
      %p184 = scmp.eq.s32.totalorder %s18, 0
      %p185 = por %p183, %p184
      %p186 = scmp.ne.s32.totalorder %s178, %s180
      %p187 = scmp.eq.s32.totalorder %s23, 1
      %p188 = por %p186, %p187
      %p189 = scmp.ne.s32.totalorder %s180, %s181
      %p190 = scmp.eq.s32.totalorder %s23, 0
      %p191 = por %p189, %p190
      %p192 = scmp.ne.s32.totalorder %s180, %s181
      %p193 = scmp.eq.s32.totalorder %s24, 1
      %p194 = por %p192, %p193
      %p196 = scmp.ne.s32.totalorder %s181, %s195
      %p197 = scmp.eq.s32.totalorder %s24, 0
      %p198 = por %p196, %p197
      %s200 = sadd.s32 %s199, 1
      %p203 = scmp.eq.s32.totalorder %s18, 1
      %p204 = scmp.ne.s32.totalorder %s199, %s201
      %p205 = scmp.eq.s32.totalorder %s18, 0
      %p206 = por %p204, %p205
      %p207 = scmp.ne.s32.totalorder %s199, %s201
      %p208 = scmp.eq.s32.totalorder %s23, 1
      %p209 = por %p207, %p208
      %p210 = scmp.ne.s32.totalorder %s201, %s202
      %p211 = scmp.eq.s32.totalorder %s23, 0
      %p212 = por %p210, %p211
      %p213 = scmp.ne.s32.totalorder %s201, %s202
      %p214 = scmp.eq.s32.totalorder %s24, 1
      %p215 = por %p213, %p214
      %p217 = scmp.ne.s32.totalorder %s202, %s216
      %p218 = scmp.eq.s32.totalorder %s24, 0
      %p219 = por %p217, %p218
      %s220 = ssub.s32 %s18, %s25
      %p221 = scmp.eq.s32.totalorder %s220, 0
      %s223 = sadd.s32 %s222, 1
      %s224 = scalar_select %p221, %s222, %s223
      %p227 = pneg %p221
      %p228 = scmp.eq.s32.totalorder %s18, 1
      %p229 = por %p227, %p228
      %p230 = scmp.ne.s32.totalorder %s222, %s225
      %p231 = scmp.eq.s32.totalorder %s18, 0
      %p232 = por %p230, %p231
      %p233 = scmp.ne.s32.totalorder %s222, %s225
      %p234 = scmp.eq.s32.totalorder %s23, 1
      %p235 = por %p233, %p234
      %p236 = scmp.ne.s32.totalorder %s225, %s226
      %p237 = scmp.eq.s32.totalorder %s23, 0
      %p238 = por %p236, %p237
      %p239 = scmp.ne.s32.totalorder %s225, %s226
      %p240 = scmp.eq.s32.totalorder %s24, 1
      %p241 = por %p239, %p240
      %p243 = scmp.ne.s32.totalorder %s226, %s242
      %p244 = scmp.eq.s32.totalorder %s24, 0
      %p245 = por %p243, %p244
      %p246 = scmp.le.s32.totalorder 1, %s18
      %p247 = scmp.lt.s32.totalorder %s18, 3
      %p248 = pnand %p246, %p247
      %p249 = pneg %p248
      // Predicated region
      $region9: #{tpu_custom_call.1} parent=5 // pred_check
        _
      $region10: #{tpu_custom_call.1} parent=5 // pred_check_branch
        %251 = sbr.rel (%p248) target = $region12
      $region11: #{tpu_custom_call.1} parent=5 // pred_region
        %s252 = ssub.s32 %s18, 1
        // Predicated region
        $region13: #{tpu_custom_call.1} parent=11 // pred_check
          %p253 = pneg %p65
        $region14: #{tpu_custom_call.1} parent=11 // pred_check_branch
          %255 = sbr.rel (%p253) target = $region16
        $region15: #{tpu_custom_call.1} parent=11 // pred_region
          _
        $region16: #{tpu_custom_call.1} parent=11 // pred_fallthru
          _
        // Predicated region
        $region17: #{tpu_custom_call.1} parent=11 // pred_check
          %p256 = pneg %p86
        $region18: #{tpu_custom_call.1} parent=11 // pred_check_branch
          %258 = sbr.rel (%p256) target = $region20
        $region19: #{tpu_custom_call.1} parent=11 // pred_region
          _
        $region20: #{tpu_custom_call.1} parent=11 // pred_fallthru
          _
        // Predicated region
        $region21: #{tpu_custom_call.1} parent=11 // pred_check
          %p259 = pneg %p107
        $region22: #{tpu_custom_call.1} parent=11 // pred_check_branch
          %261 = sbr.rel (%p259) target = $region24
        $region23: #{tpu_custom_call.1} parent=11 // pred_region
          _
        $region24: #{tpu_custom_call.1} parent=11 // pred_fallthru
          _
        // Predicated region
        $region25: #{tpu_custom_call.1} parent=11 // pred_check
          %p262 = pneg %p128
        $region26: #{tpu_custom_call.1} parent=11 // pred_check_branch
          %264 = sbr.rel (%p262) target = $region28
        $region27: #{tpu_custom_call.1} parent=11 // pred_region
          _
        $region28: #{tpu_custom_call.1} parent=11 // pred_fallthru
          _
        // Predicated region
        $region29: #{tpu_custom_call.1} parent=11 // pred_check
          %p265 = pneg %p149
        $region30: #{tpu_custom_call.1} parent=11 // pred_check_branch
          %267 = sbr.rel (%p265) target = $region32
        $region31: #{tpu_custom_call.1} parent=11 // pred_region
          _
        $region32: #{tpu_custom_call.1} parent=11 // pred_fallthru
          _
        // Predicated region
        $region33: #{tpu_custom_call.1} parent=11 // pred_check
          %p268 = pneg %p170
        $region34: #{tpu_custom_call.1} parent=11 // pred_check_branch
          %270 = sbr.rel (%p268) target = $region36
        $region35: #{tpu_custom_call.1} parent=11 // pred_region
          _
        $region36: #{tpu_custom_call.1} parent=11 // pred_fallthru
          _
        // Predicated region
        $region37: #{tpu_custom_call.1} parent=11 // pred_check
          %p271 = pneg %p191
        $region38: #{tpu_custom_call.1} parent=11 // pred_check_branch
          %273 = sbr.rel (%p271) target = $region40
        $region39: #{tpu_custom_call.1} parent=11 // pred_region
          _
        $region40: #{tpu_custom_call.1} parent=11 // pred_fallthru
          _
        // Predicated region
        $region41: #{tpu_custom_call.1} parent=11 // pred_check
          %p274 = pneg %p212
        $region42: #{tpu_custom_call.1} parent=11 // pred_check_branch
          %276 = sbr.rel (%p274) target = $region44
        $region43: #{tpu_custom_call.1} parent=11 // pred_region
          _
        $region44: #{tpu_custom_call.1} parent=11 // pred_fallthru
          _
      $region12: #{tpu_custom_call.1} parent=5 // pred_fallthru
        _
      %p277 = scmp.lt.s32.totalorder %s18, 2
      // Predicated region
      $region45: #{tpu_custom_call.1} parent=5 // pred_check
        %p278 = pneg %p277
      $region46: #{tpu_custom_call.1} parent=5 // pred_check_branch
        %280 = sbr.rel (%p278) target = $region48
      $region47: #{tpu_custom_call.1} parent=5 // pred_region
        // Predicated region
        $region49: #{tpu_custom_call.1} parent=47 // pred_check
          %p281 = pneg %p38
        $region50: #{tpu_custom_call.1} parent=47 // pred_check_branch
          %283 = sbr.rel (%p281) target = $region52
        $region51: #{tpu_custom_call.1} parent=47 // pred_region
          %p284 = scmp.lt.s32.totalorder %s18, 1
          %s285 = scalar_select %p284, %s18, 1
          %s286 = smul.addr %s285, 2
          %s287 = smul.addr %s286, 8
          %s288 = scalar_lea.vmem %s0, %s287
        $region52: #{tpu_custom_call.1} parent=47 // pred_fallthru
          _
      $region48: #{tpu_custom_call.1} parent=5 // pred_fallthru
        _
      %p289 = scmp.le.s32.totalorder 1, %s18
      %p290 = scmp.lt.s32.totalorder %s18, 3
      %p291 = pnand %p289, %p290
      %p292 = pneg %p291
      // Predicated region
      $region53: #{tpu_custom_call.1} parent=5 // pred_check
        _
      $region54: #{tpu_custom_call.1} parent=5 // pred_check_branch
        %294 = sbr.rel (%p291) target = $region56
      $region55: #{tpu_custom_call.1} parent=5 // pred_region
        %s295 = ssub.s32 %s18, 1
        %p296 = scmp.lt.s32.totalorder %s23, 1
        %s297 = scalar_select %p296, %s23, 1
        %s298 = smul.addr %s297, 2
        %s299 = smul.addr %s298, 8
        %s300 = scalar_lea.vmem %s0, %s299
        %p301 = pneg %p44
        %p302 = pneg %p41
        %p303 = pneg %p65
        %p304 = pneg %p62
        %p305 = pneg %p86
        %p306 = pneg %p83
        %p307 = pneg %p107
        %p308 = pneg %p104
        %p309 = pneg %p128
        %p310 = pneg %p125
        %p311 = pneg %p149
        %p312 = pneg %p146
        %p313 = pneg %p170
        %p314 = pneg %p167
        %p315 = pneg %p191
        %p316 = pneg %p188
        %p317 = pneg %p212
        %p318 = pneg %p209
        %p319 = pneg %p238
        %p320 = pneg %p235
        %s321 = sand.u32 %s225, 1
        %s322 = scalar_lea.sflag [#allocation4], %s321
        %s323 = sand.u32 %s225, 1
        %s324 = smul.addr %s323, 16
        %s325 = scalar_lea.vmem [#allocation3], %s324
        %p326 = scmp.lt.s32.totalorder %s23, 1
        %s327 = scalar_select %p326, %s23, 1
        %s328 = smul.addr %s327, 2
        %s329 = smul.addr %s328, 8
        %s330 = scalar_lea.vmem %s0, %s329
        %v332 = vld [vmem:[%s330] sm:$0xff]
        %v333 = vld [vmem:[%s330 + $0x8] sm:$0xff]
        %v334 = vpack.c.bf16 %v333, %v332
        %v335 = vld [vmem:[%s1] sm:$0xff]
        %v336 = vld [vmem:[%s1 + $0x8] sm:$0xff]
        %v337 = vld [vmem:[%s1 + $0x10] sm:$0xff]
        %v338 = vld [vmem:[%s1 + $0x18] sm:$0xff]
        %v339 = vld [vmem:[%s2] sm:$0x3]
        %v341 = vlaneseq
        %v342 = vshrl.u32 %v341, 7
        %v343 = vsub.s32 0, %v342
        %v344 = vrot.slane %v339, %v343
        %v345 = vlaneseq
        %v346 = vshrl.u32 %v345, 7
        %v347 = vsub.s32 1, %v346
        %v348 = vrot.slane %v339, %v347
        %v355 = vunpack.c.l.b16 %v335
        %v356 = vunpack.c.h.b16 %v335
        %v357 = vunpack.c.l.b16 %v336
        %v358 = vunpack.c.h.b16 %v336
        %v359 = vunpack.c.l.b16 %v337
        %v360 = vunpack.c.h.b16 %v337
        %v361 = vunpack.c.l.b16 %v338
        %v362 = vunpack.c.h.b16 %v338
        %v363 = vpack.c.b16 %v357, %v355
        %v364 = vpack.c.b16 %v358, %v356
        %v365 = vpack.c.b16 %v361, %v359
        %v366 = vpack.c.b16 %v362, %v360
        %vm371 = vcmask 261120
        %v373 = vsel %vm371, %v334, 0
        %375 = vmatprep.subr.bf16.mxu0 0
        %376 = vmatpush1.bf16.msra.mxu0 0
        %377 = vmatprep.subr.bf16.mxu0 0
        %378 = vmatpush1.bf16.msra.mxu0 0
        %379 = vmatprep.subr.bf16.mxu0 0
        %380 = vmatpush1.bf16.msra.mxu0 0
        %381 = vmatprep.subr.bf16.mxu0 0
        %382 = vmatpush1.bf16.msra.mxu0 0
        %383 = vmatprep.subr.bf16.mxu0 0
        %384 = vmatpush1.bf16.msra.mxu0 0
        %385 = vmatprep.subr.bf16.mxu0 0
        %386 = vmatpush1.bf16.msra.mxu0 0
        %387 = vmatprep.subr.bf16.mxu0 %v366
        %388 = vmatpush1.bf16.msra.mxu0 %v365
        %389 = vmatprep.subr.bf16.mxu0 %v364
        %390 = vmatpush1.bf16.msra.mxu0 %v363
        %391 = vmatprep.subr.bf16.mxu0 0
        %392 = vmatpush2.bf16.msra.mxu0 0
        %393 = vmatprep.subr.bf16.mxu0 0
        %394 = vmatpush2.bf16.msra.mxu0 0
        %395 = vmatprep.subr.bf16.mxu0 0
        %396 = vmatpush2.bf16.msra.mxu0 0
        %397 = vmatprep.subr.bf16.mxu0 0
        %398 = vmatpush2.bf16.msra.mxu0 0
        %399 = vmatprep.subr.bf16.mxu0 0
        %400 = vmatpush2.bf16.msra.mxu0 0
        %401 = vmatprep.subr.bf16.mxu0 0
        %402 = vmatpush2.bf16.msra.mxu0 0
        %403 = vmatprep.subr.bf16.mxu0 0
        %404 = vmatpush2.bf16.msra.mxu0 0
        %405 = vmatprep.subr.bf16.mxu0 0
        %406 = vmatpush2.bf16.msra.mxu0 0
        %407 = vmatprep.mubr.bf16.mxu0 0
        %408 = vmatmul.mubr.bf16.gmra.mxu0 %v373
        %v409 = vpop.f32.mrf.mxu0
        %v410 = vadd.f32 %v344, %v409
        %v411 = vpop.f32.mrf.mxu0
        %v412 = vadd.f32 %v348, %v411
        %v413 = vpop.f32.mrf.mxu0
        %v414 = vadd.f32 %v344, %v413
        %v415 = vpop.f32.mrf.mxu0
        %v416 = vadd.f32 %v348, %v415
        %417 = vdwg.mxu0
        %v418 = vmul.f32 %v412, 0.5
        %v419 = vmul.f32 %v416, 0.5
        %v420 = vtanh.pop %v418
        %v421 = vtanh.pop %v419
        %v422 = vmul.f32 %v420, 0.5
        %v423 = vmul.f32 %v421, 0.5
        %v424 = vadd.f32 %v422, 0.5
        %v425 = vadd.f32 %v423, 0.5
        %v426 = vmul.f32 %v410, %v424
        %v427 = vmul.f32 %v414, %v425
        %v428 = vld [vmem:[%s3] sm:$0x1f]
        %v429 = vlaneseq
        %v430 = vshrl.u32 %v429, 7
        %v431 = vsub.s32 4, %v430
        %v432 = vrot.slane %v428, %v431
        %v433 = vmul.f32 %v426, %v432
        %v434 = vmul.f32 %v427, %v432
        %435 = vst [vmem:[#allocation2] sm:$0xff] 0.0
        %436 = vst [vmem:[#allocation2 + $0x8] sm:$0xff] %v426
        %437 = vst [vmem:[#allocation2 + $0x10] sm:$0xff] %v427
        %v438 = vld [vmem:[#allocation2 + $0x7] sm:$0xff]
        %v439 = vld [vmem:[#allocation2 + $0xf] sm:$0xff]
        %v440 = vlaneseq
        %v441 = vshrl.u32 %v440, 7
        %v442 = vsub.s32 3, %v441
        %v443 = vrot.slane %v428, %v442
        %v444 = vmul.f32 %v438, %v443
        %v445 = vmul.f32 %v439, %v443
        %v446 = vadd.f32 %v433, %v444
        %v447 = vadd.f32 %v434, %v445
        %v448 = vld [vmem:[#allocation2 + $0x6] sm:$0xff]
        %v449 = vld [vmem:[#allocation2 + $0xe] sm:$0xff]
        %v450 = vlaneseq
        %v451 = vshrl.u32 %v450, 7
        %v452 = vsub.s32 2, %v451
        %v453 = vrot.slane %v428, %v452
        %v454 = vmul.f32 %v448, %v453
        %v455 = vmul.f32 %v449, %v453
        %v456 = vadd.f32 %v446, %v454
        %v457 = vadd.f32 %v447, %v455
        %v458 = vld [vmem:[#allocation2 + $0x5] sm:$0xff]
        %v459 = vld [vmem:[#allocation2 + $0xd] sm:$0xff]
        %v460 = vlaneseq
        %v461 = vshrl.u32 %v460, 7
        %v462 = vsub.s32 1, %v461
        %v463 = vrot.slane %v428, %v462
        %v464 = vmul.f32 %v458, %v463
        %v465 = vmul.f32 %v459, %v463
        %v466 = vadd.f32 %v456, %v464
        %v467 = vadd.f32 %v457, %v465
        %v468 = vld [vmem:[#allocation2 + $0x4] sm:$0xff]
        %v469 = vld [vmem:[#allocation2 + $0xc] sm:$0xff]
        %v470 = vlaneseq
        %v471 = vshrl.u32 %v470, 7
        %v472 = vsub.s32 0, %v471
        %v473 = vrot.slane %v428, %v472
        %v474 = vmul.f32 %v468, %v473
        %v475 = vmul.f32 %v469, %v473
        %v476 = vadd.f32 %v466, %v474
        %v477 = vadd.f32 %v467, %v475
        %v478 = vld [vmem:[%s4] sm:$0x1]
        %v480 = vlaneseq
        %v481 = vshrl.u32 %v480, 7
        %v482 = vsub.s32 0, %v481
        %v483 = vrot.slane %v478, %v482
        %v485 = vadd.f32 %v476, %v483
        %v486 = vadd.f32 %v477, %v483
        %v487 = vld [vmem:[%s5] sm:$0x1]
        %v489 = vlaneseq
        %v490 = vshrl.u32 %v489, 7
        %v491 = vsub.s32 0, %v490
        %v492 = vrot.slane %v487, %v491
        %v494 = vmul.f32 %v485, %v492
        %v495 = vmul.f32 %v486, %v492
        %v496 = vld [vmem:[%s6] sm:$0x1]
        %v498 = vlaneseq
        %v499 = vshrl.u32 %v498, 7
        %v500 = vsub.s32 0, %v499
        %v501 = vrot.slane %v496, %v500
        %v503 = vadd.f32 %v494, %v501
        %v504 = vadd.f32 %v495, %v501
        %v505 = vmul.f32 %v503, 0.5
        %v506 = vmul.f32 %v504, 0.5
        %v507 = vtanh.pop %v505
        %v508 = vtanh.pop %v506
        %v509 = vmul.f32 %v507, 0.5
        %v510 = vmul.f32 %v508, 0.5
        %v511 = vadd.f32 %v509, 0.5
        %v512 = vadd.f32 %v510, 0.5
        %v513 = vmul.f32 %v503, %v511
        %v514 = vmul.f32 %v504, %v512
        %v515 = vpack.c.bf16 %v514, %v513
        %v516 = vld [vmem:[%s7] sm:$0xf]
        %v517 = vld [vmem:[%s7 + $0x4] sm:$0xf]
        %v518 = vld [vmem:[%s7 + $0x8] sm:$0xf]
        %v519 = vld [vmem:[%s7 + $0xc] sm:$0xf]
        %v520 = vld [vmem:[%s7 + $0x10] sm:$0xf]
        %v521 = vld [vmem:[%s7 + $0x14] sm:$0xf]
        %v522 = vld [vmem:[%s7 + $0x18] sm:$0xf]
        %v523 = vld [vmem:[%s7 + $0x1c] sm:$0xf]
        %v524 = vld [vmem:[%s7 + $0x20] sm:$0xf]
        %v525 = vld [vmem:[%s7 + $0x24] sm:$0xf]
        %v526 = vld [vmem:[%s7 + $0x28] sm:$0xf]
        %v527 = vld [vmem:[%s7 + $0x2c] sm:$0xf]
        %v528 = vld [vmem:[%s7 + $0x30] sm:$0xf]
        %v529 = vld [vmem:[%s7 + $0x34] sm:$0xf]
        %v530 = vld [vmem:[%s7 + $0x38] sm:$0xf]
        %v531 = vld [vmem:[%s7 + $0x3c] sm:$0xf]
        %v532 = vld [vmem:[%s8] sm:$0x1]
        %v534 = vlaneseq
        %v535 = vshrl.u32 %v534, 7
        %v536 = vsub.s32 0, %v535
        %v537 = vrot.slane %v532, %v536
        %v555 = vunpack.c.l.b16 %v516
        %v556 = vunpack.c.l.b16 %v517
        %v557 = vunpack.c.l.b16 %v518
        %v558 = vunpack.c.l.b16 %v519
        %v559 = vunpack.c.l.b16 %v520
        %v560 = vunpack.c.l.b16 %v521
        %v561 = vunpack.c.l.b16 %v522
        %v562 = vunpack.c.l.b16 %v523
        %v563 = vunpack.c.l.b16 %v524
        %v564 = vunpack.c.l.b16 %v525
        %v565 = vunpack.c.l.b16 %v526
        %v566 = vunpack.c.l.b16 %v527
        %v567 = vunpack.c.l.b16 %v528
        %v568 = vunpack.c.l.b16 %v529
        %v569 = vunpack.c.l.b16 %v530
        %v570 = vunpack.c.l.b16 %v531
        %v571 = vpack.c.b16 %v556, %v555
        %v572 = vpack.c.b16 %v558, %v557
        %v573 = vpack.c.b16 %v560, %v559
        %v574 = vpack.c.b16 %v562, %v561
        %v575 = vpack.c.b16 %v564, %v563
        %v576 = vpack.c.b16 %v566, %v565
        %v577 = vpack.c.b16 %v568, %v567
        %v578 = vpack.c.b16 %v570, %v569
        %587 = vmatprep.subr.bf16.mxu0 0
        %588 = vmatpush1.bf16.msra.mxu0 %v578
        %589 = vmatprep.subr.bf16.mxu0 0
        %590 = vmatpush1.bf16.msra.mxu0 %v577
        %591 = vmatprep.subr.bf16.mxu0 0
        %592 = vmatpush1.bf16.msra.mxu0 %v576
        %593 = vmatprep.subr.bf16.mxu0 0
        %594 = vmatpush1.bf16.msra.mxu0 %v575
        %595 = vmatprep.subr.bf16.mxu0 0
        %596 = vmatpush1.bf16.msra.mxu0 %v574
        %597 = vmatprep.subr.bf16.mxu0 0
        %598 = vmatpush1.bf16.msra.mxu0 %v573
        %599 = vmatprep.subr.bf16.mxu0 0
        %600 = vmatpush1.bf16.msra.mxu0 %v572
        %601 = vmatprep.subr.bf16.mxu0 0
        %602 = vmatpush1.bf16.msra.mxu0 %v571
        %603 = vmatprep.subr.bf16.mxu0 0
        %604 = vmatpush2.bf16.msra.mxu0 0
        %605 = vmatprep.subr.bf16.mxu0 0
        %606 = vmatpush2.bf16.msra.mxu0 0
        %607 = vmatprep.subr.bf16.mxu0 0
        %608 = vmatpush2.bf16.msra.mxu0 0
        %609 = vmatprep.subr.bf16.mxu0 0
        %610 = vmatpush2.bf16.msra.mxu0 0
        %611 = vmatprep.subr.bf16.mxu0 0
        %612 = vmatpush2.bf16.msra.mxu0 0
        %613 = vmatprep.subr.bf16.mxu0 0
        %614 = vmatpush2.bf16.msra.mxu0 0
        %615 = vmatprep.subr.bf16.mxu0 0
        %616 = vmatpush2.bf16.msra.mxu0 0
        %617 = vmatprep.subr.bf16.mxu0 0
        %618 = vmatpush2.bf16.msra.mxu0 0
        %619 = vmatprep.mubr.bf16.mxu0 0
        %620 = vmatmul.mubr.bf16.gmra.mxu0 %v515
        %v621 = vpop.f32.mrf.mxu0
        %v622 = vadd.f32 %v537, %v621
        %v623 = vpop.f32.mrf.mxu0
        %v624 = vpop.f32.mrf.mxu0
        %v625 = vadd.f32 %v537, %v624
        %v626 = vpop.f32.mrf.mxu0
        %627 = vdwg.mxu0
        %628 = vst.msk [vmem:[%s325] sm:$0xff] %vm371, %v622
        %629 = vst.msk [vmem:[%s325 + $0x8] sm:$0xff] %vm371, %v625
        %s630 = sand.u32 %s225, 1
        %s631 = scalar_lea.sflag [#allocation4], %s630
        %s632 = sand.u32 %s225, 1
        %s633 = smul.addr %s632, 16
        %s634 = scalar_lea.vmem [#allocation3], %s633
        // Predicated region
        $region57: #{tpu_custom_call.1} parent=55 // pred_check
          %p635 = pneg %p235
        $region58: #{tpu_custom_call.1} parent=55 // pred_check_branch
          %637 = sbr.rel (%p635) target = $region60
        $region59: #{tpu_custom_call.1} parent=55 // pred_region
          %s639 = ssub.s32 256, 256
          %640 = vsyncadd %s631, %s639
          %s641 = smul.addr %s23, 2
          %s642 = smul.addr %s641, 128
          %s643 = scalar_lea.hbm %s9, %s642
          %s644 = sshll.u32 %s634, 4
          %s645 = int_to_ptr.vmem [resolvable:$true] %s644
          %650 = dma.vmem_to_hbm [thread:$0]  %s645, 256, %s643, %s631, 128, 128, 8
        $region60: #{tpu_custom_call.1} parent=55 // pred_fallthru
          _
      $region56: #{tpu_custom_call.1} parent=5 // pred_fallthru
        _
      %p651 = scmp.le.s32.totalorder 2, %s18
      // Predicated region
      $region61: #{tpu_custom_call.1} parent=5 // pred_check
        %p652 = pneg %p651
      $region62: #{tpu_custom_call.1} parent=5 // pred_check_branch
        %654 = sbr.rel (%p652) target = $region64
      $region63: #{tpu_custom_call.1} parent=5 // pred_region
        %s655 = ssub.s32 %s18, 2
        // Predicated region
        $region65: #{tpu_custom_call.1} parent=63 // pred_check
          %p656 = pneg %p241
        $region66: #{tpu_custom_call.1} parent=63 // pred_check_branch
          %658 = sbr.rel (%p656) target = $region68
        $region67: #{tpu_custom_call.1} parent=63 // pred_region
          %s659 = sand.u32 %s226, 1
          %s660 = scalar_lea.sflag [#allocation4], %s659
          %s661 = sand.u32 %s226, 1
          %s662 = smul.addr %s661, 16
          %s663 = scalar_lea.vmem [#allocation3], %s662
          %664 = dma.done %s660, 256
        $region68: #{tpu_custom_call.1} parent=63 // pred_fallthru
          _
      $region64: #{tpu_custom_call.1} parent=5 // pred_fallthru
        _
    $region6: #{tpu_custom_call.1} parent=1 // loop_footer
      %s22 = sadd.s32 1, %s18
    $region7: #{tpu_custom_call.1} parent=1 // loop_footer_branch
      %17 = sbr.rel target = $region3
    $region8: #{tpu_custom_call.1} parent=1 // loop_exit
      _
    %665 = vsyncpa [#allocation4], 1
    %s666 = scalar_lea.sflag [#allocation4], 1
    %667 = vsyncpa %s666, 1

</llo_original>
